<compile_context>
chip_gen: v7x
topology: tpu7x:2x2x1
jax: 0.10.0
libtpu: 0.0.40
codegen_flags: <defaults>
</compile_context>

<pallas_src>
import functools

import jax
import jax.numpy as jnp
from jax import lax
from jax.experimental import pallas as pl
from jax.experimental.pallas import tpu as pltpu


def _head_kernel(xq_ref, xkv_ref, wk_ref, wq_ref, wv_ref, o_ref,
                 q_s, m_s, l_s, acc_s, *, scale, tq, tk, mxu_dtype):
    qi = pl.program_id(1)
    ki = pl.program_id(2)
    nk = pl.num_programs(2)

    # ---- init (once per (batch, q-tile)): project+scale Q, reset softmax state
    @pl.when(ki == 0)
    def _init():
        q = jnp.dot(xq_ref[...].astype(mxu_dtype),
                    wq_ref[...].astype(mxu_dtype),
                    preferred_element_type=jnp.float32)        # (tq, H)
        q_s[...] = q * scale           # scale Q (T*H elems), not scores (T*T)
        m_s[...] = jnp.full_like(m_s, -jnp.inf)
        l_s[...] = jnp.zeros_like(l_s)
        acc_s[...] = jnp.zeros_like(acc_s)

    q_start = qi * tq
    k_start = ki * tk
    # KV block entirely above the diagonal -> fully masked -> skip it.
    not_fully_masked = k_start <= q_start + (tq - 1)
    # KV block straddles the diagonal -> needs the per-element causal mask.
    needs_mask = (k_start + (tk - 1)) > q_start

    @pl.when(not_fully_masked)
    def _block():
        xkv = xkv_ref[...].astype(mxu_dtype)
        k = jnp.dot(xkv, wk_ref[...].astype(mxu_dtype),
                    preferred_element_type=jnp.float32)        # (tk, H)
        v = jnp.dot(xkv, wv_ref[...].astype(mxu_dtype),
                    preferred_element_type=jnp.float32)        # (tk, H)

        # scores with transposed contraction (no explicit k.T materialization)
        s = lax.dot_general(
            q_s[...].astype(mxu_dtype), k.astype(mxu_dtype),
            dimension_numbers=(((1,), (1,)), ((), ())),
            preferred_element_type=jnp.float32)                # (tq, tk)

        def _update(scores):
            m_prev = m_s[...]
            m_new = jnp.maximum(m_prev, scores.max(axis=-1, keepdims=True))
            alpha = jnp.exp(m_prev - m_new)
            p = jnp.exp(scores - m_new)
            l_s[...] = alpha * l_s[...] + p.sum(axis=-1, keepdims=True)
            acc_s[...] = alpha * acc_s[...] + jnp.dot(
                p.astype(mxu_dtype), v.astype(mxu_dtype),
                preferred_element_type=jnp.float32)
            m_s[...] = m_new

        @pl.when(needs_mask)          # diagonal block: build mask from offsets
        def _diag():
            row = q_start + lax.broadcasted_iota(jnp.int32, (tq, tk), 0)
            col = k_start + lax.broadcasted_iota(jnp.int32, (tq, tk), 1)
            _update(jnp.where(col <= row, s, -jnp.inf))

        @pl.when(jnp.logical_not(needs_mask))   # interior block: no mask work
        def _interior():
            _update(s)

    # ---- finalize at the last kv step
    @pl.when(ki == nk - 1)
    def _finalize():
        inv_l = pl.reciprocal(l_s[...], approx=True)
        o_ref[...] = (acc_s[...] * inv_l).astype(o_ref.dtype)

    # TODO(synk): dropout on the attention weights is treated as identity
    # (eval mode / p=0); training-time dropout would use pltpu.prng_seed +
    # pltpu.prng_random_bits to build a keep-mask on p before the P@V matmul.


def _pick_tile(n, candidates=(512, 256, 128)):
    for c in candidates:
        if n % c == 0:
            return c
    return n


def head_forward(x, wk, wq, wv, *, tq=None, tk=None, mxu_dtype=jnp.float32):
    """x: (B, T, C); wk/wq/wv: (C, H)  ->  (B, T, H).

    mxu_dtype: set to jnp.bfloat16 on v6e/v7x for ~2x MXU throughput
    (accumulation stays f32 via preferred_element_type). Default f32 keeps
    bit-faithful-ish numerics vs. the PyTorch module.
    """
    B, T, C = x.shape
    H = wk.shape[1]
    scale = C ** (-0.5)            # module scales by d_model**-0.5 (intentional)

    tq = tq or _pick_tile(T)
    tk = tk or _pick_tile(T)
    assert T % tq == 0 and T % tk == 0
    nq, nk = T // tq, T // tk

    kernel = functools.partial(_head_kernel, scale=scale, tq=tq, tk=tk,
                               mxu_dtype=mxu_dtype)

    # rough VMEM budget for the chosen tiles (double-buffered blocks + scratch)
    elt = jnp.dtype(x.dtype).itemsize
    vmem_need = (2 * (tq * C + tk * C) * elt        # x_q / x_kv blocks
                 + 2 * tq * H * elt                 # output block
                 + 2 * 3 * C * H * elt              # weights
                 + (2 * tq * H + 2 * tq) * 4)       # f32 scratch (q, acc, m, l)
    vmem_limit = int(min(max(2 * vmem_need, 8 << 20), 48 << 20))

    cost = pl.CostEstimate(
        flops=2 * B * T * C * H * (2 * nq + 1) + 4 * B * T * T * H,
        transcendentals=B * T * T,
        bytes_accessed=B * T * C * elt * (1 + nq) + 3 * C * H * elt
                       + B * T * H * elt,
    )

    return pl.pallas_call(
        kernel,
        out_shape=jax.ShapeDtypeStruct((B, T, H), x.dtype),
        grid_spec=pltpu.PrefetchScalarGridSpec(
            num_scalar_prefetch=0,
            grid=(B, nq, nk),
            in_specs=[
                # x viewed as query rows (constant across the kv axis)
                pl.BlockSpec((pl.Squeezed(), tq, C), lambda b, i, j: (b, i, 0)),
                # x viewed as key/value rows
                pl.BlockSpec((pl.Squeezed(), tk, C), lambda b, i, j: (b, j, 0)),
                pl.BlockSpec((C, H), lambda b, i, j: (0, 0)),   # Wk
                pl.BlockSpec((C, H), lambda b, i, j: (0, 0)),   # Wq
                pl.BlockSpec((C, H), lambda b, i, j: (0, 0)),   # Wv
            ],
            out_specs=pl.BlockSpec((pl.Squeezed(), tq, H),
                                   lambda b, i, j: (b, i, 0)),
            scratch_shapes=[
                pltpu.VMEM((tq, H), jnp.float32),   # scaled Q tile
                pltpu.VMEM((tq, 1), jnp.float32),   # running max  m
                pltpu.VMEM((tq, 1), jnp.float32),   # running sum  l
                pltpu.VMEM((tq, H), jnp.float32),   # output accumulator
            ],
        ),
        compiler_params=pltpu.CompilerParams(
            dimension_semantics=("parallel", "parallel", "arbitrary"),
            vmem_limit_bytes=vmem_limit,
        ),
        cost_estimate=cost,
    )(x, x, wk, wq, wv)


def _reference(x, wk, wq, wv):
    B, T, C = x.shape
    K = x @ wk
    Q = x @ wq
    V = x @ wv
    wei = (Q @ jnp.swapaxes(K, -2, -1)) * C ** (-0.5)
    mask = jnp.tril(jnp.ones((T, T), dtype=bool))
    wei = jnp.where(mask[None], wei, -jnp.inf)
    wei = jax.nn.softmax(wei, axis=-1)
    return wei @ V


if __name__ == "__main__":
    # small shapes consistent with the module: batch=2, seq=8, d_model=32, head=16
    B, T, C, H = 2, 8, 32, 16
    key = jax.random.PRNGKey(0)
    kx, kk, kq, kv = jax.random.split(key, 4)
    x = jax.random.normal(kx, (B, T, C), dtype=jnp.float32)
    # deterministic "Linear(d_model, head_size, bias=False)" weights, stored (C, H)
    wk = jax.random.normal(kk, (C, H), dtype=jnp.float32) * (C ** -0.5)
    wq = jax.random.normal(kq, (C, H), dtype=jnp.float32) * (C ** -0.5)
    wv = jax.random.normal(kv, (C, H), dtype=jnp.float32) * (C ** -0.5)

    out = head_forward(x, wk, wq, wv)
    out = jax.block_until_ready(out)

    ref = _reference(x, wk, wq, wv)
    assert out.shape == (B, T, H)
    # tolerance accounts for the approx EUP reciprocal in the softmax finalize
    assert jnp.allclose(out, ref, atol=5e-3, rtol=5e-3), (
        float(jnp.max(jnp.abs(out - ref))))
    print("KERNEL_OK")
</pallas_src>

<mosaic_0001>
module attributes {stable_mosaic.version = 11 : i64} {
  func.func @_head_kernel(%arg0: i32, %arg1: i32, %arg2: i32, %arg3: memref<1x8x32xf32, #tpu.memory_space<vmem>>, %arg4: memref<1x8x32xf32, #tpu.memory_space<vmem>>, %arg5: memref<32x16xf32, #tpu.memory_space<vmem>>, %arg6: memref<32x16xf32, #tpu.memory_space<vmem>>, %arg7: memref<32x16xf32, #tpu.memory_space<vmem>>, %arg8: memref<1x8x16xf32, #tpu.memory_space<vmem>>, %arg9: memref<8x16xf32, #tpu.memory_space<vmem>>, %arg10: memref<8x1xf32, #tpu.memory_space<vmem>>, %arg11: memref<8x1xf32, #tpu.memory_space<vmem>>, %arg12: memref<8x16xf32, #tpu.memory_space<vmem>>) attributes {dimension_semantics = [#tpu.dimension_semantics<parallel>, #tpu.dimension_semantics<parallel>, #tpu.dimension_semantics<arbitrary>], iteration_bounds = array<i64: 2, 1, 1>, scalar_prefetch = 0 : i64, scratch_operands = 4 : i64, tpu.core_type = #tpu.core_type<tc>, window_params = [{transform_indices = @transform_0, window_bounds = array<i64: 1, 8, 32>}, {transform_indices = @transform_1, window_bounds = array<i64: 1, 8, 32>}, {pipeline_mode = #tpu.pipeline_mode<synchronous>, transform_indices = @transform_2, window_bounds = array<i64: 32, 16>}, {pipeline_mode = #tpu.pipeline_mode<synchronous>, transform_indices = @transform_3, window_bounds = array<i64: 32, 16>}, {pipeline_mode = #tpu.pipeline_mode<synchronous>, transform_indices = @transform_4, window_bounds = array<i64: 32, 16>}, {transform_indices = @transform_5, window_bounds = array<i64: 1, 8, 16>}]} {
    %c0_i32 = arith.constant 0 : i32
    %0 = arith.cmpi eq, %arg2, %c0_i32 : i32
    %1 = arith.extui %0 : i1 to i32
    %c0_i32_0 = arith.constant 0 : i32
    %2 = arith.cmpi ne, %1, %c0_i32_0 : i32
    scf.if %2 {
      %c0 = arith.constant 0 : index
      %c0_6 = arith.constant 0 : index
      %c0_7 = arith.constant 0 : index
      %14 = vector.load %arg3[%c0, %c0_6, %c0_7] : memref<1x8x32xf32, #tpu.memory_space<vmem>>, vector<1x8x32xf32>
      %15 = vector.shape_cast %14 : vector<1x8x32xf32> to vector<8x32xf32>
      %c0_8 = arith.constant 0 : index
      %c0_9 = arith.constant 0 : index
      %16 = vector.load %arg6[%c0_8, %c0_9] : memref<32x16xf32, #tpu.memory_space<vmem>>, vector<32x16xf32>
      %cst = arith.constant dense<0.000000e+00> : vector<8x16xf32>
      %17 = tpu.matmul %15, %16, %cst {dimension_numbers = #tpu.dot_dimension_numbers<[1], [0], [0], [1], [0, 0, 1, 1], [], []>} : vector<8x32xf32>, vector<32x16xf32>, vector<8x16xf32> -> vector<8x16xf32>
      %cst_10 = arith.constant 0.176776692 : f32
      %18 = vector.broadcast %cst_10 : f32 to vector<8x16xf32>
      %19 = arith.mulf %17, %18 : vector<8x16xf32>
      %c0_11 = arith.constant 0 : index
      %c0_12 = arith.constant 0 : index
      %20 = vector.load %arg9[%c0_11, %c0_12] : memref<8x16xf32, #tpu.memory_space<vmem>>, vector<8x16xf32>
      tpu.vector_store %arg9[%c0_11, %c0_12], %19 {strides = array<i32>} : memref<8x16xf32, #tpu.memory_space<vmem>>, vector<8x16xf32>,
      %cst_13 = arith.constant 0xFF800000 : f32
      %21 = vector.broadcast %cst_13 : f32 to vector<8x1xf32>
      %c0_14 = arith.constant 0 : index
      %c0_15 = arith.constant 0 : index
      %22 = vector.load %arg10[%c0_14, %c0_15] : memref<8x1xf32, #tpu.memory_space<vmem>>, vector<8x1xf32>
      tpu.vector_store %arg10[%c0_14, %c0_15], %21 {strides = array<i32>} : memref<8x1xf32, #tpu.memory_space<vmem>>, vector<8x1xf32>,
      %cst_16 = arith.constant 0.000000e+00 : f32
      %23 = vector.broadcast %cst_16 : f32 to vector<8x1xf32>
      %c0_17 = arith.constant 0 : index
      %c0_18 = arith.constant 0 : index
      %24 = vector.load %arg11[%c0_17, %c0_18] : memref<8x1xf32, #tpu.memory_space<vmem>>, vector<8x1xf32>
      tpu.vector_store %arg11[%c0_17, %c0_18], %23 {strides = array<i32>} : memref<8x1xf32, #tpu.memory_space<vmem>>, vector<8x1xf32>,
      %cst_19 = arith.constant 0.000000e+00 : f32
      %25 = vector.broadcast %cst_19 : f32 to vector<8x16xf32>
      %c0_20 = arith.constant 0 : index
      %c0_21 = arith.constant 0 : index
      %26 = vector.load %arg12[%c0_20, %c0_21] : memref<8x16xf32, #tpu.memory_space<vmem>>, vector<8x16xf32>
      tpu.vector_store %arg12[%c0_20, %c0_21], %25 {strides = array<i32>} : memref<8x16xf32, #tpu.memory_space<vmem>>, vector<8x16xf32>,
    } else {
    }
    %c8_i32 = arith.constant 8 : i32
    %3 = arith.muli %arg1, %c8_i32 : i32
    %c8_i32_1 = arith.constant 8 : i32
    %4 = arith.muli %arg2, %c8_i32_1 : i32
    %c7_i32 = arith.constant 7 : i32
    %5 = arith.addi %3, %c7_i32 : i32
    %6 = arith.cmpi sle, %4, %5 : i32
    %c7_i32_2 = arith.constant 7 : i32
    %7 = arith.addi %4, %c7_i32_2 : i32
    %8 = arith.cmpi sgt, %7, %3 : i32
    %9 = arith.extui %6 : i1 to i32
    %c0_i32_3 = arith.constant 0 : i32
    %10 = arith.cmpi ne, %9, %c0_i32_3 : i32
    scf.if %10 {
      %c0 = arith.constant 0 : index
      %c0_6 = arith.constant 0 : index
      %c0_7 = arith.constant 0 : index
      %14 = vector.load %arg4[%c0, %c0_6, %c0_7] : memref<1x8x32xf32, #tpu.memory_space<vmem>>, vector<1x8x32xf32>
      %15 = vector.shape_cast %14 : vector<1x8x32xf32> to vector<8x32xf32>
      %c0_8 = arith.constant 0 : index
      %c0_9 = arith.constant 0 : index
      %16 = vector.load %arg5[%c0_8, %c0_9] : memref<32x16xf32, #tpu.memory_space<vmem>>, vector<32x16xf32>
      %cst = arith.constant dense<0.000000e+00> : vector<8x16xf32>
      %17 = tpu.matmul %15, %16, %cst {dimension_numbers = #tpu.dot_dimension_numbers<[1], [0], [0], [1], [0, 0, 1, 1], [], []>} : vector<8x32xf32>, vector<32x16xf32>, vector<8x16xf32> -> vector<8x16xf32>
      %c0_10 = arith.constant 0 : index
      %c0_11 = arith.constant 0 : index
      %18 = vector.load %arg7[%c0_10, %c0_11] : memref<32x16xf32, #tpu.memory_space<vmem>>, vector<32x16xf32>
      %cst_12 = arith.constant dense<0.000000e+00> : vector<8x16xf32>
      %19 = tpu.matmul %15, %18, %cst_12 {dimension_numbers = #tpu.dot_dimension_numbers<[1], [0], [0], [1], [0, 0, 1, 1], [], []>} : vector<8x32xf32>, vector<32x16xf32>, vector<8x16xf32> -> vector<8x16xf32>
      %c0_13 = arith.constant 0 : index
      %c0_14 = arith.constant 0 : index
      %20 = vector.load %arg9[%c0_13, %c0_14] : memref<8x16xf32, #tpu.memory_space<vmem>>, vector<8x16xf32>
      %cst_15 = arith.constant dense<0.000000e+00> : vector<8x8xf32>
      %21 = tpu.matmul %20, %17, %cst_15 {dimension_numbers = #tpu.dot_dimension_numbers<[1], [1], [0], [0], [0, 0, 1, 0], [], []>} : vector<8x16xf32>, vector<8x16xf32>, vector<8x8xf32> -> vector<8x8xf32>
      %22 = arith.extui %8 : i1 to i32
      %c0_i32_16 = arith.constant 0 : i32
      %23 = arith.cmpi ne, %22, %c0_i32_16 : i32
      scf.if %23 {
        %27 = tpu.iota {dimensions = array<i32: 0>} : vector<8x8xi32>
        %28 = vector.broadcast %3 : i32 to vector<8x8xi32>
        %29 = arith.addi %28, %27 : vector<8x8xi32>
        %30 = tpu.iota {dimensions = array<i32: 1>} : vector<8x8xi32>
        %31 = vector.broadcast %4 : i32 to vector<8x8xi32>
        %32 = arith.addi %31, %30 : vector<8x8xi32>
        %33 = arith.cmpi sle, %32, %29 : vector<8x8xi32>
        %cst_18 = arith.constant 0xFF800000 : f32
        %34 = vector.broadcast %cst_18 : f32 to vector<8x8xf32>
        %35 = arith.select %33, %21, %34 : vector<8x8xi1>, vector<8x8xf32>
        %c0_19 = arith.constant 0 : index
        %c0_20 = arith.constant 0 : index
        %36 = vector.load %arg10[%c0_19, %c0_20] : memref<8x1xf32, #tpu.memory_space<vmem>>, vector<8x1xf32>
        %cst_21 = arith.constant dense<0xFF800000> : vector<8xf32>
        %37 = vector.multi_reduction <maximumf>, %35, %cst_21 [1] : vector<8x8xf32> to vector<8xf32>
        %38 = vector.shape_cast %37 : vector<8xf32> to vector<8x1xf32>
        %39 = arith.maximumf %36, %38 : vector<8x1xf32>
        %40 = arith.subf %36, %39 : vector<8x1xf32>
        %41 = math.exp %40 : vector<8x1xf32>
        %42 = vector.broadcast %39 : vector<8x1xf32> to vector<8x8xf32>
        %43 = arith.subf %35, %42 : vector<8x8xf32>
        %44 = math.exp %43 : vector<8x8xf32>
        %c0_22 = arith.constant 0 : index
        %c0_23 = arith.constant 0 : index
        %45 = vector.load %arg11[%c0_22, %c0_23] : memref<8x1xf32, #tpu.memory_space<vmem>>, vector<8x1xf32>
        %46 = arith.mulf %41, %45 : vector<8x1xf32>
        %cst_24 = arith.constant dense<0.000000e+00> : vector<8xf32>
        %47 = vector.multi_reduction <add>, %44, %cst_24 [1] : vector<8x8xf32> to vector<8xf32>
        %48 = vector.shape_cast %47 : vector<8xf32> to vector<8x1xf32>
        %49 = arith.addf %46, %48 : vector<8x1xf32>
        %c0_25 = arith.constant 0 : index
        %c0_26 = arith.constant 0 : index
        %50 = vector.load %arg11[%c0_25, %c0_26] : memref<8x1xf32, #tpu.memory_space<vmem>>, vector<8x1xf32>
        tpu.vector_store %arg11[%c0_25, %c0_26], %49 {strides = array<i32>} : memref<8x1xf32, #tpu.memory_space<vmem>>, vector<8x1xf32>,
        %c0_27 = arith.constant 0 : index
        %c0_28 = arith.constant 0 : index
        %51 = vector.load %arg12[%c0_27, %c0_28] : memref<8x16xf32, #tpu.memory_space<vmem>>, vector<8x16xf32>
        %52 = vector.broadcast %41 : vector<8x1xf32> to vector<8x16xf32>
        %53 = arith.mulf %52, %51 : vector<8x16xf32>
        %cst_29 = arith.constant dense<0.000000e+00> : vector<8x16xf32>
        %54 = tpu.matmul %44, %19, %cst_29 {dimension_numbers = #tpu.dot_dimension_numbers<[1], [0], [0], [1], [0, 0, 1, 1], [], []>} : vector<8x8xf32>, vector<8x16xf32>, vector<8x16xf32> -> vector<8x16xf32>
        %55 = arith.addf %53, %54 : vector<8x16xf32>
        %c0_30 = arith.constant 0 : index
        %c0_31 = arith.constant 0 : index
        %56 = vector.load %arg12[%c0_30, %c0_31] : memref<8x16xf32, #tpu.memory_space<vmem>>, vector<8x16xf32>
        tpu.vector_store %arg12[%c0_30, %c0_31], %55 {strides = array<i32>} : memref<8x16xf32, #tpu.memory_space<vmem>>, vector<8x16xf32>,
        %c0_32 = arith.constant 0 : index
        %c0_33 = arith.constant 0 : index
        %57 = vector.load %arg10[%c0_32, %c0_33] : memref<8x1xf32, #tpu.memory_space<vmem>>, vector<8x1xf32>
        tpu.vector_store %arg10[%c0_32, %c0_33], %39 {strides = array<i32>} : memref<8x1xf32, #tpu.memory_space<vmem>>, vector<8x1xf32>,
      } else {
      }
      %true = arith.constant true
      %24 = arith.xori %8, %true : i1
      %25 = arith.extui %24 : i1 to i32
      %c0_i32_17 = arith.constant 0 : i32
      %26 = arith.cmpi ne, %25, %c0_i32_17 : i32
      scf.if %26 {
        %c0_18 = arith.constant 0 : index
        %c0_19 = arith.constant 0 : index
        %27 = vector.load %arg10[%c0_18, %c0_19] : memref<8x1xf32, #tpu.memory_space<vmem>>, vector<8x1xf32>
        %cst_20 = arith.constant dense<0xFF800000> : vector<8xf32>
        %28 = vector.multi_reduction <maximumf>, %21, %cst_20 [1] : vector<8x8xf32> to vector<8xf32>
        %29 = vector.shape_cast %28 : vector<8xf32> to vector<8x1xf32>
        %30 = arith.maximumf %27, %29 : vector<8x1xf32>
        %31 = arith.subf %27, %30 : vector<8x1xf32>
        %32 = math.exp %31 : vector<8x1xf32>
        %33 = vector.broadcast %30 : vector<8x1xf32> to vector<8x8xf32>
        %34 = arith.subf %21, %33 : vector<8x8xf32>
        %35 = math.exp %34 : vector<8x8xf32>
        %c0_21 = arith.constant 0 : index
        %c0_22 = arith.constant 0 : index
        %36 = vector.load %arg11[%c0_21, %c0_22] : memref<8x1xf32, #tpu.memory_space<vmem>>, vector<8x1xf32>
        %37 = arith.mulf %32, %36 : vector<8x1xf32>
        %cst_23 = arith.constant dense<0.000000e+00> : vector<8xf32>
        %38 = vector.multi_reduction <add>, %35, %cst_23 [1] : vector<8x8xf32> to vector<8xf32>
        %39 = vector.shape_cast %38 : vector<8xf32> to vector<8x1xf32>
        %40 = arith.addf %37, %39 : vector<8x1xf32>
        %c0_24 = arith.constant 0 : index
        %c0_25 = arith.constant 0 : index
        %41 = vector.load %arg11[%c0_24, %c0_25] : memref<8x1xf32, #tpu.memory_space<vmem>>, vector<8x1xf32>
        tpu.vector_store %arg11[%c0_24, %c0_25], %40 {strides = array<i32>} : memref<8x1xf32, #tpu.memory_space<vmem>>, vector<8x1xf32>,
        %c0_26 = arith.constant 0 : index
        %c0_27 = arith.constant 0 : index
        %42 = vector.load %arg12[%c0_26, %c0_27] : memref<8x16xf32, #tpu.memory_space<vmem>>, vector<8x16xf32>
        %43 = vector.broadcast %32 : vector<8x1xf32> to vector<8x16xf32>
        %44 = arith.mulf %43, %42 : vector<8x16xf32>
        %cst_28 = arith.constant dense<0.000000e+00> : vector<8x16xf32>
        %45 = tpu.matmul %35, %19, %cst_28 {dimension_numbers = #tpu.dot_dimension_numbers<[1], [0], [0], [1], [0, 0, 1, 1], [], []>} : vector<8x8xf32>, vector<8x16xf32>, vector<8x16xf32> -> vector<8x16xf32>
        %46 = arith.addf %44, %45 : vector<8x16xf32>
        %c0_29 = arith.constant 0 : index
        %c0_30 = arith.constant 0 : index
        %47 = vector.load %arg12[%c0_29, %c0_30] : memref<8x16xf32, #tpu.memory_space<vmem>>, vector<8x16xf32>
        tpu.vector_store %arg12[%c0_29, %c0_30], %46 {strides = array<i32>} : memref<8x16xf32, #tpu.memory_space<vmem>>, vector<8x16xf32>,
        %c0_31 = arith.constant 0 : index
        %c0_32 = arith.constant 0 : index
        %48 = vector.load %arg10[%c0_31, %c0_32] : memref<8x1xf32, #tpu.memory_space<vmem>>, vector<8x1xf32>
        tpu.vector_store %arg10[%c0_31, %c0_32], %30 {strides = array<i32>} : memref<8x1xf32, #tpu.memory_space<vmem>>, vector<8x1xf32>,
      } else {
      }
    } else {
    }
    %c0_i32_4 = arith.constant 0 : i32
    %11 = arith.cmpi eq, %arg2, %c0_i32_4 : i32
    %12 = arith.extui %11 : i1 to i32
    %c0_i32_5 = arith.constant 0 : i32
    %13 = arith.cmpi ne, %12, %c0_i32_5 : i32
    scf.if %13 {
      %c0 = arith.constant 0 : index
      %c0_6 = arith.constant 0 : index
      %14 = vector.load %arg11[%c0, %c0_6] : memref<8x1xf32, #tpu.memory_space<vmem>>, vector<8x1xf32>
      %15 = tpu.reciprocal %14 {approx = true} : vector<8x1xf32> -> vector<8x1xf32>
      %c0_7 = arith.constant 0 : index
      %c0_8 = arith.constant 0 : index
      %16 = vector.load %arg12[%c0_7, %c0_8] : memref<8x16xf32, #tpu.memory_space<vmem>>, vector<8x16xf32>
      %17 = vector.broadcast %15 : vector<8x1xf32> to vector<8x16xf32>
      %18 = arith.mulf %16, %17 : vector<8x16xf32>
      %c0_9 = arith.constant 0 : index
      %c0_10 = arith.constant 0 : index
      %c0_11 = arith.constant 0 : index
      %19 = vector.load %arg8[%c0_9, %c0_10, %c0_11] : memref<1x8x16xf32, #tpu.memory_space<vmem>>, vector<1x8x16xf32>
      %20 = vector.shape_cast %19 : vector<1x8x16xf32> to vector<8x16xf32>
      %21 = vector.shape_cast %18 : vector<8x16xf32> to vector<1x8x16xf32>
      tpu.vector_store %arg8[%c0_9, %c0_10, %c0_11], %21 {strides = array<i32>} : memref<1x8x16xf32, #tpu.memory_space<vmem>>, vector<1x8x16xf32>,
    } else {
    }
    return
  }
  func.func @transform_0(%arg0: i32, %arg1: i32, %arg2: i32) -> (i32, i32, i32) {
    %c0_i32 = arith.constant 0 : i32
    %c0_i32_0 = arith.constant 0 : i32
    return %arg0, %arg1, %c0_i32 : i32, i32, i32
  }
  func.func @transform_1(%arg0: i32, %arg1: i32, %arg2: i32) -> (i32, i32, i32) {
    %c0_i32 = arith.constant 0 : i32
    %c0_i32_0 = arith.constant 0 : i32
    return %arg0, %arg2, %c0_i32 : i32, i32, i32
  }
  func.func @transform_2(%arg0: i32, %arg1: i32, %arg2: i32) -> (i32, i32) {
    %c0_i32 = arith.constant 0 : i32
    %c0_i32_0 = arith.constant 0 : i32
    %c0_i32_1 = arith.constant 0 : i32
    return %c0_i32, %c0_i32_0 : i32, i32
  }
  func.func @transform_3(%arg0: i32, %arg1: i32, %arg2: i32) -> (i32, i32) {
    %c0_i32 = arith.constant 0 : i32
    %c0_i32_0 = arith.constant 0 : i32
    %c0_i32_1 = arith.constant 0 : i32
    return %c0_i32, %c0_i32_0 : i32, i32
  }
  func.func @transform_4(%arg0: i32, %arg1: i32, %arg2: i32) -> (i32, i32) {
    %c0_i32 = arith.constant 0 : i32
    %c0_i32_0 = arith.constant 0 : i32
    %c0_i32_1 = arith.constant 0 : i32
    return %c0_i32, %c0_i32_0 : i32, i32
  }
  func.func @transform_5(%arg0: i32, %arg1: i32, %arg2: i32) -> (i32, i32, i32) {
    %c0_i32 = arith.constant 0 : i32
    %c0_i32_0 = arith.constant 0 : i32
    return %arg0, %arg1, %c0_i32 : i32, i32, i32
  }
}

</mosaic_0001>

<llo_original>
// kernel: tpu_custom_call.1
$region0: #{tpu_custom_call.1}
  #allocation0 [shape = 'u32[]', space=smem, size = 0x4, offset = 0x4, fixed_abs, tag = 'smem constant byte address 0x4 - core index']
  #allocation1 [shape = 'u32[144,128]{1,0:T(1,128)}', space=vmem, size = 0x12000, scoped, tag = 'internal scratch']
  #allocation2 [shape = 'f32[8,16]{1,0:T(8,128)}', space=vmem, size = 0x1000, scoped, tag = 'scratch operand']
  #allocation3 [shape = 'f32[8,1]{1,0:T(8,128)}', space=vmem, size = 0x1000, scoped, tag = 'scratch operand']
  #allocation4 [shape = 'f32[8,1]{1,0:T(8,128)}', space=vmem, size = 0x1000, scoped, tag = 'scratch operand']
  #allocation5 [shape = 'f32[8,16]{1,0:T(8,128)}', space=vmem, size = 0x1000, scoped, tag = 'scratch operand']
  %s0 = inlined_call_operand.vmem [shape: f32[2,8,32], index: 0, kind: input, shape index: {}]
  %s1 = inlined_call_operand.vmem [shape: f32[2,8,32], index: 1, kind: input, shape index: {}]
  %s2 = inlined_call_operand.vmem [shape: f32[32,16], index: 2, kind: input, shape index: {}]
  %s3 = inlined_call_operand.vmem [shape: f32[32,16], index: 3, kind: input, shape index: {}]
  %s4 = inlined_call_operand.vmem [shape: f32[32,16], index: 4, kind: input, shape index: {}]
  %s5 = inlined_call_operand.hbm [shape: f32[2,8,16], index: 5, kind: output, shape index: {}]
  %s6 = sld [smem:[#allocation0]]
  $region73: #{tpu_custom_call.1} parent=0
    _
  %s8 = ssub.s32 1, %s6
  %s9 = scalar_select 0, %s8, %s6
  $region1: #{tpu_custom_call.1} parent=0
    #allocation6 [shape = 'u8[8192]{0}', space=vmem, size = 0x2000, scoped, tag = 'output window, operand 0']
    #allocation7 [shape = 's32[2]{0}', space=sflag, size = 0x8, scoped, tag = 'scoped memory for tpu_custom_call.1']
    %10 = vsyncpa [#allocation7], 0
    %s11 = scalar_lea.sflag [#allocation7], 1
    %12 = vsyncpa %s11, 0
    loop: start=0, step=1, limit=4
    $region2: #{tpu_custom_call.1} parent=1 // loop_pre_header
      _
    $region3: #{tpu_custom_call.1} parent=1 // loop_header
      %s14 = sphi 0, %s18
      %p15 = scmp.ge.s32.totalorder %s14, 4
      %s21 = sphi 0, %s40
      %s22 = sphi 0, %s36
      %s23 = sphi 0, %s32
      %s24 = sphi 0, %s21
      %s25 = sphi 0, %s22
      %s26 = sphi 0, %s23
      %s27 = sphi 0, %s24
      %s28 = sphi 0, %s25
      %s29 = sphi 0, %s26
      %s45 = sphi 0, %s47
      %s48 = sphi 0, %s45
      %s49 = sphi 0, %s48
      %s65 = sphi 0, %s49
      %s73 = sphi 0, %s75
      %s76 = sphi 0, %s73
      %s77 = sphi 0, %s76
      %s93 = sphi 0, %s77
      %s97 = sphi 0, %s97
      %s99 = sphi 0, %s97
      %s100 = sphi 0, %s99
      %s114 = sphi 0, %s100
      %s118 = sphi 0, %s118
      %s120 = sphi 0, %s118
      %s121 = sphi 0, %s120
      %s135 = sphi 0, %s121
      %s139 = sphi 0, %s139
      %s141 = sphi 0, %s139
      %s142 = sphi 0, %s141
      %s156 = sphi 0, %s142
      %s164 = sphi 0, %s166
      %s167 = sphi 0, %s164
      %s168 = sphi 0, %s167
      %s184 = sphi 0, %s168
    $region4: #{tpu_custom_call.1} parent=1 // loop_header_branch
      %17 = sbr.rel (%p15) target = $region8
    $region5: #{tpu_custom_call.1} parent=1 // loop_body
      %s19 = ssub.s32 %s14, 1
      %s20 = ssub.s32 %s14, 2
      %s30 = sadd.s32 1, %s23
      %p31 = scmp.ge.s32.totalorder %s30, 1
      %s32 = scalar_select %p31, 0, %s30
      %s33 = sadd.s32 1, %s22
      %s34 = scalar_select %p31, %s33, %s22
      %p35 = scmp.ge.s32.totalorder %s34, 1
      %s36 = scalar_select %p35, 0, %s34
      %s37 = sadd.s32 1, %s21
      %s38 = scalar_select %p35, %s37, %s21
      %p39 = scmp.ge.s32.totalorder %s38, 2
      %s40 = scalar_select %p39, 0, %s38
      %s41 = ssub.s32 %s21, %s40
      %s42 = ssub.s32 %s22, %s36
      %s43 = sor.u32 %s41, %s42
      %p44 = scmp.eq.s32.totalorder %s43, 0
      %s46 = sadd.s32 %s45, 1
      %s47 = scalar_select %p44, %s45, %s46
      %p50 = pneg %p44
      %p51 = scmp.eq.s32.totalorder %s14, 1
      %p52 = por %p50, %p51
      %p53 = scmp.ne.s32.totalorder %s45, %s48
      %p54 = scmp.eq.s32.totalorder %s14, 0
      %p55 = por %p53, %p54
      %p56 = scmp.ne.s32.totalorder %s45, %s48
      %p57 = scmp.eq.s32.totalorder %s19, 1
      %p58 = por %p56, %p57
      %p59 = scmp.ne.s32.totalorder %s48, %s49
      %p60 = scmp.eq.s32.totalorder %s19, 0
      %p61 = por %p59, %p60
      %p62 = scmp.ne.s32.totalorder %s48, %s49
      %p63 = scmp.eq.s32.totalorder %s20, 1
      %p64 = por %p62, %p63
      %p66 = scmp.ne.s32.totalorder %s49, %s65
      %p67 = scmp.eq.s32.totalorder %s20, 0
      %p68 = por %p66, %p67
      %s69 = ssub.s32 %s21, %s40
      %s70 = ssub.s32 %s23, %s32
      %s71 = sor.u32 %s69, %s70
      %p72 = scmp.eq.s32.totalorder %s71, 0
      %s74 = sadd.s32 %s73, 1
      %s75 = scalar_select %p72, %s73, %s74
      %p78 = pneg %p72
      %p79 = scmp.eq.s32.totalorder %s14, 1
      %p80 = por %p78, %p79
      %p81 = scmp.ne.s32.totalorder %s73, %s76
      %p82 = scmp.eq.s32.totalorder %s14, 0
      %p83 = por %p81, %p82
      %p84 = scmp.ne.s32.totalorder %s73, %s76
      %p85 = scmp.eq.s32.totalorder %s19, 1
      %p86 = por %p84, %p85
      %p87 = scmp.ne.s32.totalorder %s76, %s77
      %p88 = scmp.eq.s32.totalorder %s19, 0
      %p89 = por %p87, %p88
      %p90 = scmp.ne.s32.totalorder %s76, %s77
      %p91 = scmp.eq.s32.totalorder %s20, 1
      %p92 = por %p90, %p91
      %p94 = scmp.ne.s32.totalorder %s77, %s93
      %p95 = scmp.eq.s32.totalorder %s20, 0
      %p96 = por %p94, %p95
      %s98 = sadd.s32 %s97, 1
      %p101 = scmp.eq.s32.totalorder %s14, 1
      %p102 = scmp.ne.s32.totalorder %s97, %s99
      %p103 = scmp.eq.s32.totalorder %s14, 0
      %p104 = por %p102, %p103
      %p105 = scmp.ne.s32.totalorder %s97, %s99
      %p106 = scmp.eq.s32.totalorder %s19, 1
      %p107 = por %p105, %p106
      %p108 = scmp.ne.s32.totalorder %s99, %s100
      %p109 = scmp.eq.s32.totalorder %s19, 0
      %p110 = por %p108, %p109
      %p111 = scmp.ne.s32.totalorder %s99, %s100
      %p112 = scmp.eq.s32.totalorder %s20, 1
      %p113 = por %p111, %p112
      %p115 = scmp.ne.s32.totalorder %s100, %s114
      %p116 = scmp.eq.s32.totalorder %s20, 0
      %p117 = por %p115, %p116
      %s119 = sadd.s32 %s118, 1
      %p122 = scmp.eq.s32.totalorder %s14, 1
      %p123 = scmp.ne.s32.totalorder %s118, %s120
      %p124 = scmp.eq.s32.totalorder %s14, 0
      %p125 = por %p123, %p124
      %p126 = scmp.ne.s32.totalorder %s118, %s120
      %p127 = scmp.eq.s32.totalorder %s19, 1
      %p128 = por %p126, %p127
      %p129 = scmp.ne.s32.totalorder %s120, %s121
      %p130 = scmp.eq.s32.totalorder %s19, 0
      %p131 = por %p129, %p130
      %p132 = scmp.ne.s32.totalorder %s120, %s121
      %p133 = scmp.eq.s32.totalorder %s20, 1
      %p134 = por %p132, %p133
      %p136 = scmp.ne.s32.totalorder %s121, %s135
      %p137 = scmp.eq.s32.totalorder %s20, 0
      %p138 = por %p136, %p137
      %s140 = sadd.s32 %s139, 1
      %p143 = scmp.eq.s32.totalorder %s14, 1
      %p144 = scmp.ne.s32.totalorder %s139, %s141
      %p145 = scmp.eq.s32.totalorder %s14, 0
      %p146 = por %p144, %p145
      %p147 = scmp.ne.s32.totalorder %s139, %s141
      %p148 = scmp.eq.s32.totalorder %s19, 1
      %p149 = por %p147, %p148
      %p150 = scmp.ne.s32.totalorder %s141, %s142
      %p151 = scmp.eq.s32.totalorder %s19, 0
      %p152 = por %p150, %p151
      %p153 = scmp.ne.s32.totalorder %s141, %s142
      %p154 = scmp.eq.s32.totalorder %s20, 1
      %p155 = por %p153, %p154
      %p157 = scmp.ne.s32.totalorder %s142, %s156
      %p158 = scmp.eq.s32.totalorder %s20, 0
      %p159 = por %p157, %p158
      %s160 = ssub.s32 %s21, %s40
      %s161 = ssub.s32 %s22, %s36
      %s162 = sor.u32 %s160, %s161
      %p163 = scmp.eq.s32.totalorder %s162, 0
      %s165 = sadd.s32 %s164, 1
      %s166 = scalar_select %p163, %s164, %s165
      %p169 = pneg %p163
      %p170 = scmp.eq.s32.totalorder %s14, 1
      %p171 = por %p169, %p170
      %p172 = scmp.ne.s32.totalorder %s164, %s167
      %p173 = scmp.eq.s32.totalorder %s14, 0
      %p174 = por %p172, %p173
      %p175 = scmp.ne.s32.totalorder %s164, %s167
      %p176 = scmp.eq.s32.totalorder %s19, 1
      %p177 = por %p175, %p176
      %p178 = scmp.ne.s32.totalorder %s167, %s168
      %p179 = scmp.eq.s32.totalorder %s19, 0
      %p180 = por %p178, %p179
      %p181 = scmp.ne.s32.totalorder %s167, %s168
      %p182 = scmp.eq.s32.totalorder %s20, 1
      %p183 = por %p181, %p182
      %p185 = scmp.ne.s32.totalorder %s168, %s184
      %p186 = scmp.eq.s32.totalorder %s20, 0
      %p187 = por %p185, %p186
      %p188 = scmp.le.s32.totalorder 1, %s14
      %p189 = scmp.lt.s32.totalorder %s14, 3
      %p190 = pnand %p188, %p189
      %p191 = pneg %p190
      // Predicated region
      $region9: #{tpu_custom_call.1} parent=5 // pred_check
        _
      $region10: #{tpu_custom_call.1} parent=5 // pred_check_branch
        %193 = sbr.rel (%p190) target = $region12
      $region11: #{tpu_custom_call.1} parent=5 // pred_region
        %s194 = ssub.s32 %s14, 1
        // Predicated region
        $region13: #{tpu_custom_call.1} parent=11 // pred_check
          %p195 = pneg %p110
        $region14: #{tpu_custom_call.1} parent=11 // pred_check_branch
          %197 = sbr.rel (%p195) target = $region16
        $region15: #{tpu_custom_call.1} parent=11 // pred_region
          _
        $region16: #{tpu_custom_call.1} parent=11 // pred_fallthru
          _
        // Predicated region
        $region17: #{tpu_custom_call.1} parent=11 // pred_check
          %p198 = pneg %p131
        $region18: #{tpu_custom_call.1} parent=11 // pred_check_branch
          %200 = sbr.rel (%p198) target = $region20
        $region19: #{tpu_custom_call.1} parent=11 // pred_region
          _
        $region20: #{tpu_custom_call.1} parent=11 // pred_fallthru
          _
        // Predicated region
        $region21: #{tpu_custom_call.1} parent=11 // pred_check
          %p201 = pneg %p152
        $region22: #{tpu_custom_call.1} parent=11 // pred_check_branch
          %203 = sbr.rel (%p201) target = $region24
        $region23: #{tpu_custom_call.1} parent=11 // pred_region
          _
        $region24: #{tpu_custom_call.1} parent=11 // pred_fallthru
          _
      $region12: #{tpu_custom_call.1} parent=5 // pred_fallthru
        _
      %p204 = scmp.lt.s32.totalorder %s14, 2
      // Predicated region
      $region25: #{tpu_custom_call.1} parent=5 // pred_check
        %p205 = pneg %p204
      $region26: #{tpu_custom_call.1} parent=5 // pred_check_branch
        %207 = sbr.rel (%p205) target = $region28
      $region27: #{tpu_custom_call.1} parent=5 // pred_region
        // Predicated region
        $region29: #{tpu_custom_call.1} parent=27 // pred_check
          %p208 = pneg %p55
        $region30: #{tpu_custom_call.1} parent=27 // pred_check_branch
          %210 = sbr.rel (%p208) target = $region32
        $region31: #{tpu_custom_call.1} parent=27 // pred_region
          %p211 = scmp.lt.s32.totalorder %s21, 1
          %s212 = scalar_select %p211, %s21, 1
          %p213 = scmp.lt.s32.totalorder %s22, 0
          %s214 = scalar_select %p213, %s22, 0
          %s215 = sadd.s32 %s214, %s212
          %s216 = smul.addr %s215, 8
          %s217 = scalar_lea.vmem %s0, %s216
        $region32: #{tpu_custom_call.1} parent=27 // pred_fallthru
          _
        // Predicated region
        $region33: #{tpu_custom_call.1} parent=27 // pred_check
          %p218 = pneg %p83
        $region34: #{tpu_custom_call.1} parent=27 // pred_check_branch
          %220 = sbr.rel (%p218) target = $region36
        $region35: #{tpu_custom_call.1} parent=27 // pred_region
          %p221 = scmp.lt.s32.totalorder %s21, 1
          %s222 = scalar_select %p221, %s21, 1
          %p223 = scmp.lt.s32.totalorder %s23, 0
          %s224 = scalar_select %p223, %s23, 0
          %s225 = sadd.s32 %s224, %s222
          %s226 = smul.addr %s225, 8
          %s227 = scalar_lea.vmem %s1, %s226
        $region36: #{tpu_custom_call.1} parent=27 // pred_fallthru
          _
      $region28: #{tpu_custom_call.1} parent=5 // pred_fallthru
        _
      %p228 = scmp.le.s32.totalorder 1, %s14
      %p229 = scmp.lt.s32.totalorder %s14, 3
      %p230 = pnand %p228, %p229
      %p231 = pneg %p230
      // Predicated region
      $region37: #{tpu_custom_call.1} parent=5 // pred_check
        _
      $region38: #{tpu_custom_call.1} parent=5 // pred_check_branch
        %233 = sbr.rel (%p230) target = $region40
      $region39: #{tpu_custom_call.1} parent=5 // pred_region
        %s234 = ssub.s32 %s14, 1
        %p235 = scmp.lt.s32.totalorder %s24, 1
        %s236 = scalar_select %p235, %s24, 1
        %p237 = scmp.lt.s32.totalorder %s25, 0
        %s238 = scalar_select %p237, %s25, 0
        %s239 = sadd.s32 %s238, %s236
        %s240 = smul.addr %s239, 8
        %s241 = scalar_lea.vmem %s0, %s240
        %p242 = pneg %p61
        %p243 = pneg %p58
        %p244 = scmp.lt.s32.totalorder %s24, 1
        %s245 = scalar_select %p244, %s24, 1
        %p246 = scmp.lt.s32.totalorder %s26, 0
        %s247 = scalar_select %p246, %s26, 0
        %s248 = sadd.s32 %s247, %s245
        %s249 = smul.addr %s248, 8
        %s250 = scalar_lea.vmem %s1, %s249
        %p251 = pneg %p89
        %p252 = pneg %p86
        %p253 = pneg %p110
        %p254 = pneg %p107
        %p255 = pneg %p131
        %p256 = pneg %p128
        %p257 = pneg %p152
        %p258 = pneg %p149
        %p259 = pneg %p180
        %p260 = pneg %p177
        %s261 = sand.u32 %s167, 1
        %s262 = scalar_lea.sflag [#allocation7], %s261
        %s263 = sand.u32 %s167, 1
        %s264 = smul.addr %s263, 8
        %s265 = scalar_lea.vmem [#allocation6], %s264
        %p266 = scmp.lt.s32.totalorder %s24, 1
        %s267 = scalar_select %p266, %s24, 1
        %p268 = scmp.lt.s32.totalorder %s25, 0
        %s269 = scalar_select %p268, %s25, 0
        %s270 = sadd.s32 %s269, %s267
        %s271 = smul.addr %s270, 8
        %s272 = scalar_lea.vmem %s0, %s271
        %p273 = scmp.lt.s32.totalorder %s24, 1
        %s274 = scalar_select %p273, %s24, 1
        %p275 = scmp.lt.s32.totalorder %s26, 0
        %s276 = scalar_select %p275, %s26, 0
        %s277 = sadd.s32 %s276, %s274
        %s278 = smul.addr %s277, 8
        %s279 = scalar_lea.vmem %s1, %s278
        %p280 = scmp.eq.s32.totalorder %s26, 0
        // Predicated region
        $region41: #{tpu_custom_call.1} parent=39 // pred_check
          %p281 = pneg %p280
        $region42: #{tpu_custom_call.1} parent=39 // pred_check_branch
          %283 = sbr.rel (%p281) target = $region44
        $region43: #{tpu_custom_call.1} parent=39 // pred_region
          %v284 = vld [vmem:[%s272] sm:$0xff]
          %v285 = vld [vmem:[%s3] sm:$0xff]
          %v286 = vld [vmem:[%s3 + $0x8] sm:$0xff]
          %v287 = vld [vmem:[%s3 + $0x10] sm:$0xff]
          %v288 = vld [vmem:[%s3 + $0x18] sm:$0xff]
          %vm289 = vcmask 261120
          %v291 = vsel %vm289, %v284, 0
          %293 = vmatprep.subr.mxu0 0.0
          %294 = vmatpush1.msra.mxu0 %v285
          %295 = vmatprep.subr.mxu0 0.0
          %296 = vmatpush1.msra.mxu0 %v286
          %297 = vmatprep.subr.mxu0 0.0
          %298 = vmatpush1.msra.mxu0 %v287
          %299 = vmatprep.subr.mxu0 0.0
          %300 = vmatpush1.msra.mxu0 %v288
          %301 = vmatprep.subr.mxu0 0.0
          %302 = vmatpush1.msra.mxu0 0.0
          %303 = vmatprep.subr.mxu0 0.0
          %304 = vmatpush1.msra.mxu0 0.0
          %305 = vmatprep.subr.mxu0 0.0
          %306 = vmatpush1.msra.mxu0 0.0
          %307 = vmatprep.subr.mxu0 0.0
          %308 = vmatpush1.msra.mxu0 0.0
          %309 = vmatprep.subr.mxu0 0.0
          %310 = vmatpush1.msra.mxu0 0.0
          %311 = vmatprep.subr.mxu0 0.0
          %312 = vmatpush1.msra.mxu0 0.0
          %313 = vmatprep.subr.mxu0 0.0
          %314 = vmatpush1.msra.mxu0 0.0
          %315 = vmatprep.subr.mxu0 0.0
          %316 = vmatpush1.msra.mxu0 0.0
          %317 = vmatprep.subr.mxu0 0.0
          %318 = vmatpush1.msra.mxu0 0.0
          %319 = vmatprep.subr.mxu0 0.0
          %320 = vmatpush1.msra.mxu0 0.0
          %321 = vmatprep.subr.mxu0 0.0
          %322 = vmatpush1.msra.mxu0 0.0
          %323 = vmatprep.subr.mxu0 0.0
          %324 = vmatpush1.msra.mxu0 0.0
          %325 = vmatprep.subr.mxu0 0.0
          %326 = vmatpush1.msra.mxu0 0.0
          %327 = vmatprep.subr.mxu0 0.0
          %328 = vmatpush1.msra.mxu0 0.0
          %329 = vmatprep.subr.mxu0 0.0
          %330 = vmatpush1.msra.mxu0 0.0
          %331 = vmatprep.subr.mxu0 0.0
          %332 = vmatpush1.msra.mxu0 0.0
          %333 = vmatprep.subr.mxu0 0.0
          %334 = vmatpush1.msra.mxu0 0.0
          %335 = vmatprep.subr.mxu0 0.0
          %336 = vmatpush1.msra.mxu0 0.0
          %337 = vmatprep.subr.mxu0 0.0
          %338 = vmatpush1.msra.mxu0 0.0
          %339 = vmatprep.subr.mxu0 0.0
          %340 = vmatpush1.msra.mxu0 0.0
          %341 = vmatprep.subr.mxu0 0.0
          %342 = vmatpush1.msra.mxu0 0.0
          %343 = vmatprep.subr.mxu0 0.0
          %344 = vmatpush1.msra.mxu0 0.0
          %345 = vmatprep.subr.mxu0 0.0
          %346 = vmatpush1.msra.mxu0 0.0
          %347 = vmatprep.subr.mxu0 0.0
          %348 = vmatpush1.msra.mxu0 0.0
          %349 = vmatprep.subr.mxu0 0.0
          %350 = vmatpush1.msra.mxu0 0.0
          %351 = vmatprep.subr.mxu0 0.0
          %352 = vmatpush1.msra.mxu0 0.0
          %353 = vmatprep.subr.mxu0 0.0
          %354 = vmatpush1.msra.mxu0 0.0
          %355 = vmatprep.subr.mxu0 0.0
          %356 = vmatpush1.msra.mxu0 0.0
          %357 = vmatprep.mubr.f32.mxu0 0.0
          %358 = vmatmul.mubr.f32.gmra.mrb[0].mxu0 %v291
          %v359 = vpop.f32.mrb[0].mxu0
          %v360 = vadd.f32 0.0, %v359
          %v361 = vpop.f32.mrb[0].mxu0
          %362 = vdwg.mxu0
          %v363 = vmul.f32 %v360, 0.17677669
          %vm364 = vcmask 130048
          %365 = vst.msk [vmem:[#allocation2] sm:$0xff] %vm364, %v363
          %vm366 = vcmask 7168
          %367 = vst.msk [vmem:[#allocation3] sm:$0xff] %vm366, -inf
          %368 = vst.msk [vmem:[#allocation4] sm:$0xff] %vm366, 0.0
          %369 = vst.msk [vmem:[#allocation5] sm:$0xff] %vm364, 0.0
        $region44: #{tpu_custom_call.1} parent=39 // pred_fallthru
          _
        %s370 = smul.u32 %s25, 8
        %s371 = smul.u32 %s26, 8
        %s372 = sadd.s32 %s370, 7
        %p373 = scmp.le.s32.totalorder %s371, %s372
        %s374 = sadd.s32 %s371, 7
        %p375 = scmp.gt.s32.totalorder %s374, %s370
        // Predicated region
        $region45: #{tpu_custom_call.1} parent=39 // pred_check
          %p376 = pneg %p373
        $region46: #{tpu_custom_call.1} parent=39 // pred_check_branch
          %378 = sbr.rel (%p376) target = $region48
        $region47: #{tpu_custom_call.1} parent=39 // pred_region
          %v379 = vld [vmem:[%s279] sm:$0xff]
          %v380 = vld [vmem:[%s2] sm:$0xff]
          %v381 = vld [vmem:[%s2 + $0x8] sm:$0xff]
          %v382 = vld [vmem:[%s2 + $0x10] sm:$0xff]
          %v383 = vld [vmem:[%s2 + $0x18] sm:$0xff]
          %vm384 = vcmask 261120
          %v386 = vsel %vm384, %v379, 0
          %388 = vmatprep.subr.mxu0 0.0
          %389 = vmatpush1.msra.mxu0 %v380
          %390 = vmatprep.subr.mxu0 0.0
          %391 = vmatpush1.msra.mxu0 %v381
          %392 = vmatprep.subr.mxu0 0.0
          %393 = vmatpush1.msra.mxu0 %v382
          %394 = vmatprep.subr.mxu0 0.0
          %395 = vmatpush1.msra.mxu0 %v383
          %396 = vmatprep.subr.mxu0 0.0
          %397 = vmatpush1.msra.mxu0 0.0
          %398 = vmatprep.subr.mxu0 0.0
          %399 = vmatpush1.msra.mxu0 0.0
          %400 = vmatprep.subr.mxu0 0.0
          %401 = vmatpush1.msra.mxu0 0.0
          %402 = vmatprep.subr.mxu0 0.0
          %403 = vmatpush1.msra.mxu0 0.0
          %404 = vmatprep.subr.mxu0 0.0
          %405 = vmatpush1.msra.mxu0 0.0
          %406 = vmatprep.subr.mxu0 0.0
          %407 = vmatpush1.msra.mxu0 0.0
          %408 = vmatprep.subr.mxu0 0.0
          %409 = vmatpush1.msra.mxu0 0.0
          %410 = vmatprep.subr.mxu0 0.0
          %411 = vmatpush1.msra.mxu0 0.0
          %412 = vmatprep.subr.mxu0 0.0
          %413 = vmatpush1.msra.mxu0 0.0
          %414 = vmatprep.subr.mxu0 0.0
          %415 = vmatpush1.msra.mxu0 0.0
          %416 = vmatprep.subr.mxu0 0.0
          %417 = vmatpush1.msra.mxu0 0.0
          %418 = vmatprep.subr.mxu0 0.0
          %419 = vmatpush1.msra.mxu0 0.0
          %420 = vmatprep.subr.mxu0 0.0
          %421 = vmatpush1.msra.mxu0 0.0
          %422 = vmatprep.subr.mxu0 0.0
          %423 = vmatpush1.msra.mxu0 0.0
          %424 = vmatprep.subr.mxu0 0.0
          %425 = vmatpush1.msra.mxu0 0.0
          %426 = vmatprep.subr.mxu0 0.0
          %427 = vmatpush1.msra.mxu0 0.0
          %428 = vmatprep.subr.mxu0 0.0
          %429 = vmatpush1.msra.mxu0 0.0
          %430 = vmatprep.subr.mxu0 0.0
          %431 = vmatpush1.msra.mxu0 0.0
          %432 = vmatprep.subr.mxu0 0.0
          %433 = vmatpush1.msra.mxu0 0.0
          %434 = vmatprep.subr.mxu0 0.0
          %435 = vmatpush1.msra.mxu0 0.0
          %436 = vmatprep.subr.mxu0 0.0
          %437 = vmatpush1.msra.mxu0 0.0
          %438 = vmatprep.subr.mxu0 0.0
          %439 = vmatpush1.msra.mxu0 0.0
          %440 = vmatprep.subr.mxu0 0.0
          %441 = vmatpush1.msra.mxu0 0.0
          %442 = vmatprep.subr.mxu0 0.0
          %443 = vmatpush1.msra.mxu0 0.0
          %444 = vmatprep.subr.mxu0 0.0
          %445 = vmatpush1.msra.mxu0 0.0
          %446 = vmatprep.subr.mxu0 0.0
          %447 = vmatpush1.msra.mxu0 0.0
          %448 = vmatprep.subr.mxu0 0.0
          %449 = vmatpush1.msra.mxu0 0.0
          %450 = vmatprep.subr.mxu0 0.0
          %451 = vmatpush1.msra.mxu0 0.0
          %452 = vmatprep.mubr.f32.mxu0 0.0
          %453 = vmatmul.mubr.f32.gmra.mrb[0].mxu0 %v386
          %v454 = vpop.f32.mrb[0].mxu0
          %v455 = vadd.f32 0.0, %v454
          %v456 = vpop.f32.mrb[0].mxu0
          %457 = vdwg.mxu0
          %v458 = vld [vmem:[%s4] sm:$0xff]
          %v459 = vld [vmem:[%s4 + $0x8] sm:$0xff]
          %v460 = vld [vmem:[%s4 + $0x10] sm:$0xff]
          %v461 = vld [vmem:[%s4 + $0x18] sm:$0xff]
          %462 = vmatprep.subr.mxu0 0.0
          %463 = vmatpush1.msra.mxu0 %v458
          %464 = vmatprep.subr.mxu0 0.0
          %465 = vmatpush1.msra.mxu0 %v459
          %466 = vmatprep.subr.mxu0 0.0
          %467 = vmatpush1.msra.mxu0 %v460
          %468 = vmatprep.subr.mxu0 0.0
          %469 = vmatpush1.msra.mxu0 %v461
          %470 = vmatprep.subr.mxu0 0.0
          %471 = vmatpush1.msra.mxu0 0.0
          %472 = vmatprep.subr.mxu0 0.0
          %473 = vmatpush1.msra.mxu0 0.0
          %474 = vmatprep.subr.mxu0 0.0
          %475 = vmatpush1.msra.mxu0 0.0
          %476 = vmatprep.subr.mxu0 0.0
          %477 = vmatpush1.msra.mxu0 0.0
          %478 = vmatprep.subr.mxu0 0.0
          %479 = vmatpush1.msra.mxu0 0.0
          %480 = vmatprep.subr.mxu0 0.0
          %481 = vmatpush1.msra.mxu0 0.0
          %482 = vmatprep.subr.mxu0 0.0
          %483 = vmatpush1.msra.mxu0 0.0
          %484 = vmatprep.subr.mxu0 0.0
          %485 = vmatpush1.msra.mxu0 0.0
          %486 = vmatprep.subr.mxu0 0.0
          %487 = vmatpush1.msra.mxu0 0.0
          %488 = vmatprep.subr.mxu0 0.0
          %489 = vmatpush1.msra.mxu0 0.0
          %490 = vmatprep.subr.mxu0 0.0
          %491 = vmatpush1.msra.mxu0 0.0
          %492 = vmatprep.subr.mxu0 0.0
          %493 = vmatpush1.msra.mxu0 0.0
          %494 = vmatprep.subr.mxu0 0.0
          %495 = vmatpush1.msra.mxu0 0.0
          %496 = vmatprep.subr.mxu0 0.0
          %497 = vmatpush1.msra.mxu0 0.0
          %498 = vmatprep.subr.mxu0 0.0
          %499 = vmatpush1.msra.mxu0 0.0
          %500 = vmatprep.subr.mxu0 0.0
          %501 = vmatpush1.msra.mxu0 0.0
          %502 = vmatprep.subr.mxu0 0.0
          %503 = vmatpush1.msra.mxu0 0.0
          %504 = vmatprep.subr.mxu0 0.0
          %505 = vmatpush1.msra.mxu0 0.0
          %506 = vmatprep.subr.mxu0 0.0
          %507 = vmatpush1.msra.mxu0 0.0
          %508 = vmatprep.subr.mxu0 0.0
          %509 = vmatpush1.msra.mxu0 0.0
          %510 = vmatprep.subr.mxu0 0.0
          %511 = vmatpush1.msra.mxu0 0.0
          %512 = vmatprep.subr.mxu0 0.0
          %513 = vmatpush1.msra.mxu0 0.0
          %514 = vmatprep.subr.mxu0 0.0
          %515 = vmatpush1.msra.mxu0 0.0
          %516 = vmatprep.subr.mxu0 0.0
          %517 = vmatpush1.msra.mxu0 0.0
          %518 = vmatprep.subr.mxu0 0.0
          %519 = vmatpush1.msra.mxu0 0.0
          %520 = vmatprep.subr.mxu0 0.0
          %521 = vmatpush1.msra.mxu0 0.0
          %522 = vmatprep.subr.mxu0 0.0
          %523 = vmatpush1.msra.mxu0 0.0
          %524 = vmatprep.subr.mxu0 0.0
          %525 = vmatpush1.msra.mxu0 0.0
          %526 = vmatprep.mubr.f32.mxu0 0.0
          %527 = vmatmul.mubr.f32.gmra.mrb[0].mxu0 %v386
          %v528 = vpop.f32.mrb[0].mxu0
          %v529 = vadd.f32 0.0, %v528
          %v530 = vpop.f32.mrb[0].mxu0
          %531 = vdwg.mxu0
          %v532 = vld [vmem:[#allocation2] sm:$0xff]
          %vm533 = vcmask 130048
          %v535 = vsel %vm533, %v532, 0
          %v538 = vsel %vm533, %v455, 0
          %540 = vmatprep.subr.mxu0 0.0
          %541 = vmatpush1.xpose.msra.mxu0 %v538
          %542 = vmatprep.subr.mxu0 0.0
          %543 = vmatpush1.xpose.msra.mxu0 0.0
          %544 = vmatprep.subr.mxu0 0.0
          %545 = vmatpush1.xpose.msra.mxu0 0.0
          %546 = vmatprep.subr.mxu0 0.0
          %547 = vmatpush1.xpose.msra.mxu0 0.0
          %548 = vmatprep.subr.mxu0 0.0
          %549 = vmatpush1.xpose.msra.mxu0 0.0
          %550 = vmatprep.subr.mxu0 0.0
          %551 = vmatpush1.xpose.msra.mxu0 0.0
          %552 = vmatprep.subr.mxu0 0.0
          %553 = vmatpush1.xpose.msra.mxu0 0.0
          %554 = vmatprep.subr.mxu0 0.0
          %555 = vmatpush1.xpose.msra.mxu0 0.0
          %556 = vmatprep.subr.mxu0 0.0
          %557 = vmatpush1.xpose.msra.mxu0 0.0
          %558 = vmatprep.subr.mxu0 0.0
          %559 = vmatpush1.xpose.msra.mxu0 0.0
          %560 = vmatprep.subr.mxu0 0.0
          %561 = vmatpush1.xpose.msra.mxu0 0.0
          %562 = vmatprep.subr.mxu0 0.0
          %563 = vmatpush1.xpose.msra.mxu0 0.0
          %564 = vmatprep.subr.mxu0 0.0
          %565 = vmatpush1.xpose.msra.mxu0 0.0
          %566 = vmatprep.subr.mxu0 0.0
          %567 = vmatpush1.xpose.msra.mxu0 0.0
          %568 = vmatprep.subr.mxu0 0.0
          %569 = vmatpush1.xpose.msra.mxu0 0.0
          %570 = vmatprep.subr.mxu0 0.0
          %571 = vmatpush1.xpose.msra.mxu0 0.0
          %572 = vmatprep.subr.mxu0 0.0
          %573 = vmatpush1.xpose.msra.mxu0 0.0
          %574 = vmatprep.subr.mxu0 0.0
          %575 = vmatpush1.xpose.msra.mxu0 0.0
          %576 = vmatprep.subr.mxu0 0.0
          %577 = vmatpush1.xpose.msra.mxu0 0.0
          %578 = vmatprep.subr.mxu0 0.0
          %579 = vmatpush1.xpose.msra.mxu0 0.0
          %580 = vmatprep.subr.mxu0 0.0
          %581 = vmatpush1.xpose.msra.mxu0 0.0
          %582 = vmatprep.subr.mxu0 0.0
          %583 = vmatpush1.xpose.msra.mxu0 0.0
          %584 = vmatprep.subr.mxu0 0.0
          %585 = vmatpush1.xpose.msra.mxu0 0.0
          %586 = vmatprep.subr.mxu0 0.0
          %587 = vmatpush1.xpose.msra.mxu0 0.0
          %588 = vmatprep.subr.mxu0 0.0
          %589 = vmatpush1.xpose.msra.mxu0 0.0
          %590 = vmatprep.subr.mxu0 0.0
          %591 = vmatpush1.xpose.msra.mxu0 0.0
          %592 = vmatprep.subr.mxu0 0.0
          %593 = vmatpush1.xpose.msra.mxu0 0.0
          %594 = vmatprep.subr.mxu0 0.0
          %595 = vmatpush1.xpose.msra.mxu0 0.0
          %596 = vmatprep.subr.mxu0 0.0
          %597 = vmatpush1.xpose.msra.mxu0 0.0
          %598 = vmatprep.subr.mxu0 0.0
          %599 = vmatpush1.xpose.msra.mxu0 0.0
          %600 = vmatprep.subr.mxu0 0.0
          %601 = vmatpush1.xpose.msra.mxu0 0.0
          %602 = vmatprep.subr.mxu0 0.0
          %603 = vmatpush1.xpose.msra.mxu0 0.0
          %604 = vmatprep.mubr.f32.mxu0 0.0
          %605 = vmatmul.mubr.f32.gmra.mrb[0].mxu0 %v535
          %v606 = vpop.f32.mrb[0].mxu0
          %v607 = vadd.f32 0.0, %v606
          %v608 = vpop.f32.mrb[0].mxu0
          %609 = vdwg.mxu0
          // Predicated region
          $region49: #{tpu_custom_call.1} parent=47 // pred_check
            %p610 = pneg %p375
          $region50: #{tpu_custom_call.1} parent=47 // pred_check_branch
            %612 = sbr.rel (%p610) target = $region52
          $region51: #{tpu_custom_call.1} parent=47 // pred_region
            %v613 = vlaneseq
            %v614 = vshrl.u32 %v613, 7
            %v615 = vstv %s370
            %v616 = vadd.s32 %v615, %v614
            %v617 = vlaneseq
            %v618 = vand.u32 %v617, 127
            %v619 = vstv %s371
            %v620 = vadd.s32 %v619, %v618
            %vm621 = vcmp.le.s32.totalorder %v620, %v616
            %v622 = vsel %vm621, %v607, -inf
            %v623 = vld [vmem:[#allocation3] sm:$0xff]
            %vm624 = vcmask 64512
            %v625 = vsel %vm624, %v622, -inf
            %626 = vmax.xlane.f32.xlu0 %v625
            %v627 = vpop.xlane.xlu0 %626
            %v628 = vmax.f32 %v623, %v627
            %v629 = vsub.f32 %v623, %v628
            %v630 = vmul.f32 %v629, 1.442695
            %v631 = vpow.pop %v630
            %633 = vset.pattern.permute.xlu0 0
            %634 = vperm.xlu0 %633, %v628
            %v635 = vpop.permute.xlu0 %634
            %v637 = vsub.f32 %v622, %v635
            %v638 = vmul.f32 %v637, 1.442695
            %v639 = vpow.pop %v638
            %v640 = vld [vmem:[#allocation4] sm:$0xff]
            %v641 = vmul.f32 %v631, %v640
            %v642 = vsel %vm624, %v639, 0.0
            %643 = vadd.xlane.f32.xlu0 %v642
            %v644 = vpop.xlane.xlu0 %643
            %v645 = vadd.f32 %v641, %v644
            %vm646 = vcmask 7168
            %647 = vst.msk [vmem:[#allocation4] sm:$0xff] %vm646, %v645
            %v648 = vld [vmem:[#allocation5] sm:$0xff]
            %650 = vset.pattern.permute.xlu0 0
            %651 = vperm.xlu0 %650, %v631
            %v652 = vpop.permute.xlu0 %651
            %v654 = vmul.f32 %v652, %v648
            %v656 = vsel %vm624, %v639, 0
            %658 = vmatprep.subr.mxu0 0.0
            %659 = vmatpush1.msra.mxu0 %v529
            %660 = vmatprep.subr.mxu0 0.0
            %661 = vmatpush1.msra.mxu0 0.0
            %662 = vmatprep.subr.mxu0 0.0
            %663 = vmatpush1.msra.mxu0 0.0
            %664 = vmatprep.subr.mxu0 0.0
            %665 = vmatpush1.msra.mxu0 0.0
            %666 = vmatprep.subr.mxu0 0.0
            %667 = vmatpush1.msra.mxu0 0.0
            %668 = vmatprep.subr.mxu0 0.0
            %669 = vmatpush1.msra.mxu0 0.0
            %670 = vmatprep.subr.mxu0 0.0
            %671 = vmatpush1.msra.mxu0 0.0
            %672 = vmatprep.subr.mxu0 0.0
            %673 = vmatpush1.msra.mxu0 0.0
            %674 = vmatprep.subr.mxu0 0.0
            %675 = vmatpush1.msra.mxu0 0.0
            %676 = vmatprep.subr.mxu0 0.0
            %677 = vmatpush1.msra.mxu0 0.0
            %678 = vmatprep.subr.mxu0 0.0
            %679 = vmatpush1.msra.mxu0 0.0
            %680 = vmatprep.subr.mxu0 0.0
            %681 = vmatpush1.msra.mxu0 0.0
            %682 = vmatprep.subr.mxu0 0.0
            %683 = vmatpush1.msra.mxu0 0.0
            %684 = vmatprep.subr.mxu0 0.0
            %685 = vmatpush1.msra.mxu0 0.0
            %686 = vmatprep.subr.mxu0 0.0
            %687 = vmatpush1.msra.mxu0 0.0
            %688 = vmatprep.subr.mxu0 0.0
            %689 = vmatpush1.msra.mxu0 0.0
            %690 = vmatprep.subr.mxu0 0.0
            %691 = vmatpush1.msra.mxu0 0.0
            %692 = vmatprep.subr.mxu0 0.0
            %693 = vmatpush1.msra.mxu0 0.0
            %694 = vmatprep.subr.mxu0 0.0
            %695 = vmatpush1.msra.mxu0 0.0
            %696 = vmatprep.subr.mxu0 0.0
            %697 = vmatpush1.msra.mxu0 0.0
            %698 = vmatprep.subr.mxu0 0.0
            %699 = vmatpush1.msra.mxu0 0.0
            %700 = vmatprep.subr.mxu0 0.0
            %701 = vmatpush1.msra.mxu0 0.0
            %702 = vmatprep.subr.mxu0 0.0
            %703 = vmatpush1.msra.mxu0 0.0
            %704 = vmatprep.subr.mxu0 0.0
            %705 = vmatpush1.msra.mxu0 0.0
            %706 = vmatprep.subr.mxu0 0.0
            %707 = vmatpush1.msra.mxu0 0.0
            %708 = vmatprep.subr.mxu0 0.0
            %709 = vmatpush1.msra.mxu0 0.0
            %710 = vmatprep.subr.mxu0 0.0
            %711 = vmatpush1.msra.mxu0 0.0
            %712 = vmatprep.subr.mxu0 0.0
            %713 = vmatpush1.msra.mxu0 0.0
            %714 = vmatprep.subr.mxu0 0.0
            %715 = vmatpush1.msra.mxu0 0.0
            %716 = vmatprep.subr.mxu0 0.0
            %717 = vmatpush1.msra.mxu0 0.0
            %718 = vmatprep.subr.mxu0 0.0
            %719 = vmatpush1.msra.mxu0 0.0
            %720 = vmatprep.subr.mxu0 0.0
            %721 = vmatpush1.msra.mxu0 0.0
            %722 = vmatprep.mubr.f32.mxu0 0.0
            %723 = vmatmul.mubr.f32.gmra.mrb[0].mxu0 %v656
            %v724 = vpop.f32.mrb[0].mxu0
            %v725 = vadd.f32 0.0, %v724
            %v726 = vpop.f32.mrb[0].mxu0
            %727 = vdwg.mxu0
            %v728 = vadd.f32 %v654, %v725
            %729 = vst.msk [vmem:[#allocation5] sm:$0xff] %vm533, %v728
            %730 = vst.msk [vmem:[#allocation3] sm:$0xff] %vm646, %v628
          $region52: #{tpu_custom_call.1} parent=47 // pred_fallthru
            _
          %p731 = scmp.le.s32.totalorder %s374, %s370
          // Predicated region
          $region53: #{tpu_custom_call.1} parent=47 // pred_check
            %p732 = pneg %p731
          $region54: #{tpu_custom_call.1} parent=47 // pred_check_branch
            %734 = sbr.rel (%p732) target = $region56
          $region55: #{tpu_custom_call.1} parent=47 // pred_region
            %v735 = vld [vmem:[#allocation3] sm:$0xff]
            %vm736 = vcmask 64512
            %v737 = vsel %vm736, %v607, -inf
            %738 = vmax.xlane.f32.xlu0 %v737
            %v739 = vpop.xlane.xlu0 %738
            %v740 = vmax.f32 %v735, %v739
            %v741 = vsub.f32 %v735, %v740
            %v742 = vmul.f32 %v741, 1.442695
            %v743 = vpow.pop %v742
            %745 = vset.pattern.permute.xlu0 0
            %746 = vperm.xlu0 %745, %v740
            %v747 = vpop.permute.xlu0 %746
            %v749 = vsub.f32 %v607, %v747
            %v750 = vmul.f32 %v749, 1.442695
            %v751 = vpow.pop %v750
            %v752 = vld [vmem:[#allocation4] sm:$0xff]
            %v753 = vmul.f32 %v743, %v752
            %v754 = vsel %vm736, %v751, 0.0
            %755 = vadd.xlane.f32.xlu0 %v754
            %v756 = vpop.xlane.xlu0 %755
            %v757 = vadd.f32 %v753, %v756
            %vm758 = vcmask 7168
            %759 = vst.msk [vmem:[#allocation4] sm:$0xff] %vm758, %v757
            %v760 = vld [vmem:[#allocation5] sm:$0xff]
            %762 = vset.pattern.permute.xlu0 0
            %763 = vperm.xlu0 %762, %v743
            %v764 = vpop.permute.xlu0 %763
            %v766 = vmul.f32 %v764, %v760
            %v768 = vsel %vm736, %v751, 0
            %770 = vmatprep.subr.mxu0 0.0
            %771 = vmatpush1.msra.mxu0 %v529
            %772 = vmatprep.subr.mxu0 0.0
            %773 = vmatpush1.msra.mxu0 0.0
            %774 = vmatprep.subr.mxu0 0.0
            %775 = vmatpush1.msra.mxu0 0.0
            %776 = vmatprep.subr.mxu0 0.0
            %777 = vmatpush1.msra.mxu0 0.0
            %778 = vmatprep.subr.mxu0 0.0
            %779 = vmatpush1.msra.mxu0 0.0
            %780 = vmatprep.subr.mxu0 0.0
            %781 = vmatpush1.msra.mxu0 0.0
            %782 = vmatprep.subr.mxu0 0.0
            %783 = vmatpush1.msra.mxu0 0.0
            %784 = vmatprep.subr.mxu0 0.0
            %785 = vmatpush1.msra.mxu0 0.0
            %786 = vmatprep.subr.mxu0 0.0
            %787 = vmatpush1.msra.mxu0 0.0
            %788 = vmatprep.subr.mxu0 0.0
            %789 = vmatpush1.msra.mxu0 0.0
            %790 = vmatprep.subr.mxu0 0.0
            %791 = vmatpush1.msra.mxu0 0.0
            %792 = vmatprep.subr.mxu0 0.0
            %793 = vmatpush1.msra.mxu0 0.0
            %794 = vmatprep.subr.mxu0 0.0
            %795 = vmatpush1.msra.mxu0 0.0
            %796 = vmatprep.subr.mxu0 0.0
            %797 = vmatpush1.msra.mxu0 0.0
            %798 = vmatprep.subr.mxu0 0.0
            %799 = vmatpush1.msra.mxu0 0.0
            %800 = vmatprep.subr.mxu0 0.0
            %801 = vmatpush1.msra.mxu0 0.0
            %802 = vmatprep.subr.mxu0 0.0
            %803 = vmatpush1.msra.mxu0 0.0
            %804 = vmatprep.subr.mxu0 0.0
            %805 = vmatpush1.msra.mxu0 0.0
            %806 = vmatprep.subr.mxu0 0.0
            %807 = vmatpush1.msra.mxu0 0.0
            %808 = vmatprep.subr.mxu0 0.0
            %809 = vmatpush1.msra.mxu0 0.0
            %810 = vmatprep.subr.mxu0 0.0
            %811 = vmatpush1.msra.mxu0 0.0
            %812 = vmatprep.subr.mxu0 0.0
            %813 = vmatpush1.msra.mxu0 0.0
            %814 = vmatprep.subr.mxu0 0.0
            %815 = vmatpush1.msra.mxu0 0.0
            %816 = vmatprep.subr.mxu0 0.0
            %817 = vmatpush1.msra.mxu0 0.0
            %818 = vmatprep.subr.mxu0 0.0
            %819 = vmatpush1.msra.mxu0 0.0
            %820 = vmatprep.subr.mxu0 0.0
            %821 = vmatpush1.msra.mxu0 0.0
            %822 = vmatprep.subr.mxu0 0.0
            %823 = vmatpush1.msra.mxu0 0.0
            %824 = vmatprep.subr.mxu0 0.0
            %825 = vmatpush1.msra.mxu0 0.0
            %826 = vmatprep.subr.mxu0 0.0
            %827 = vmatpush1.msra.mxu0 0.0
            %828 = vmatprep.subr.mxu0 0.0
            %829 = vmatpush1.msra.mxu0 0.0
            %830 = vmatprep.subr.mxu0 0.0
            %831 = vmatpush1.msra.mxu0 0.0
            %832 = vmatprep.subr.mxu0 0.0
            %833 = vmatpush1.msra.mxu0 0.0
            %834 = vmatprep.mubr.f32.mxu0 0.0
            %835 = vmatmul.mubr.f32.gmra.mrb[0].mxu0 %v768
            %v836 = vpop.f32.mrb[0].mxu0
            %v837 = vadd.f32 0.0, %v836
            %v838 = vpop.f32.mrb[0].mxu0
            %839 = vdwg.mxu0
            %v840 = vadd.f32 %v766, %v837
            %841 = vst.msk [vmem:[#allocation5] sm:$0xff] %vm533, %v840
            %842 = vst.msk [vmem:[#allocation3] sm:$0xff] %vm758, %v740
          $region56: #{tpu_custom_call.1} parent=47 // pred_fallthru
            _
        $region48: #{tpu_custom_call.1} parent=39 // pred_fallthru
          _
        // Predicated region
        $region57: #{tpu_custom_call.1} parent=39 // pred_check
          %p843 = pneg %p280
        $region58: #{tpu_custom_call.1} parent=39 // pred_check_branch
          %845 = sbr.rel (%p843) target = $region60
        $region59: #{tpu_custom_call.1} parent=39 // pred_region
          %v846 = vld [vmem:[#allocation4] sm:$0xff]
          %v847 = vrcp.pop %v846
          %v848 = vld [vmem:[#allocation5] sm:$0xff]
          %850 = vset.pattern.permute.xlu0 0
          %851 = vperm.xlu0 %850, %v847
          %v852 = vpop.permute.xlu0 %851
          %v854 = vmul.f32 %v848, %v852
          %vm855 = vcmask 130048
          %856 = vst.msk [vmem:[%s265] sm:$0xff] %vm855, %v854
        $region60: #{tpu_custom_call.1} parent=39 // pred_fallthru
          _
        %s857 = sand.u32 %s167, 1
        %s858 = scalar_lea.sflag [#allocation7], %s857
        %s859 = sand.u32 %s167, 1
        %s860 = smul.addr %s859, 8
        %s861 = scalar_lea.vmem [#allocation6], %s860
        // Predicated region
        $region61: #{tpu_custom_call.1} parent=39 // pred_check
          %p862 = pneg %p177
        $region62: #{tpu_custom_call.1} parent=39 // pred_check_branch
          %864 = sbr.rel (%p862) target = $region64
        $region63: #{tpu_custom_call.1} parent=39 // pred_region
          %s866 = ssub.s32 128, 128
          %867 = vsyncadd %s858, %s866
          %s868 = sadd.s32 %s25, %s24
          %s869 = smul.addr %s868, 128
          %s870 = scalar_lea.hbm %s5, %s869
          %s872 = sshll.u32 %s861, 4
          %s873 = int_to_ptr.vmem [resolvable:$true] %s872
          %875 = dma.vmem_to_hbm [thread:$0]  %s873, 128, %s870, %s858
        $region64: #{tpu_custom_call.1} parent=39 // pred_fallthru
          _
      $region40: #{tpu_custom_call.1} parent=5 // pred_fallthru
        _
      %p876 = scmp.le.s32.totalorder 2, %s14
      // Predicated region
      $region65: #{tpu_custom_call.1} parent=5 // pred_check
        %p877 = pneg %p876
      $region66: #{tpu_custom_call.1} parent=5 // pred_check_branch
        %879 = sbr.rel (%p877) target = $region68
      $region67: #{tpu_custom_call.1} parent=5 // pred_region
        %s880 = ssub.s32 %s14, 2
        // Predicated region
        $region69: #{tpu_custom_call.1} parent=67 // pred_check
          %p881 = pneg %p183
        $region70: #{tpu_custom_call.1} parent=67 // pred_check_branch
          %883 = sbr.rel (%p881) target = $region72
        $region71: #{tpu_custom_call.1} parent=67 // pred_region
          %s884 = sand.u32 %s168, 1
          %s885 = scalar_lea.sflag [#allocation7], %s884
          %s886 = sand.u32 %s168, 1
          %s887 = smul.addr %s886, 8
          %s888 = scalar_lea.vmem [#allocation6], %s887
          %889 = dma.done %s885, 128
        $region72: #{tpu_custom_call.1} parent=67 // pred_fallthru
          _
      $region68: #{tpu_custom_call.1} parent=5 // pred_fallthru
        _
    $region6: #{tpu_custom_call.1} parent=1 // loop_footer
      %s18 = sadd.s32 1, %s14
    $region7: #{tpu_custom_call.1} parent=1 // loop_footer_branch
      %13 = sbr.rel target = $region3
    $region8: #{tpu_custom_call.1} parent=1 // loop_exit
      _
    %890 = vsyncpa [#allocation7], 1
    %s891 = scalar_lea.sflag [#allocation7], 1
    %892 = vsyncpa %s891, 1

</llo_original>
